<compile_context>
chip_gen: v5e
topology: v5e:2x2
jax: 0.10.0
libtpu: 0.0.40
codegen_flags: <defaults>
</compile_context>

<pallas_src>
import jax
import jax.numpy as jnp
from jax.experimental import pallas as pl
from jax.experimental.pallas import tpu as pltpu


def _round_up(x, m):
    return ((x + m - 1) // m) * m


def _make_gcn_kernel(tk, deg_col, feat_resident, approx_recip):
    def kernel(adj_ref, feat_ref, w_ref, b_ref, out_ref, acc_ref):
        # adj_ref : [TM, TK]          int8, adj[i, j] = 1 iff edge j -> i
        # feat_ref: [TK, Din_p] or [N_k, Din_p] (resident)  compute dtype;
        #           column `deg_col` is all-ones so the row-sum (in-degree)
        #           falls out of the same MXU pass.
        # w_ref   : [Din_p, Dout_p]   Linear weight (W.T, zero-padded), resident
        # b_ref   : [1, Dout_p]       Linear bias (zero-padded, f32), resident
        # out_ref : [TM, Dout_p]
        # acc_ref : [TM, Din_p]       f32 accumulator (neighbor-feature sums)
        k = pl.program_id(1)

        @pl.when(k == 0)
        def _init():
            acc_ref[...] = jnp.zeros_like(acc_ref)

        if feat_resident:
            start = pl.multiple_of(k * tk, tk)
            feat = feat_ref[pl.ds(start, tk), :]
        else:
            feat = feat_ref[...]

        # Widen int8 adjacency to the matmul dtype; MXU accumulates in f32.
        adj = adj_ref[...].astype(feat.dtype)
        acc_ref[...] += jnp.dot(adj, feat, preferred_element_type=jnp.float32)

        @pl.when(k == pl.num_programs(1) - 1)
        def _finalize():
            acc = acc_ref[...]
            # In-degree (includes the synthetic self-loop added in the wrapper
            # for originally zero-in-degree rows, so mean == feature there).
            deg = acc[:, deg_col:deg_col + 1]
            safe = jnp.maximum(deg, 1.0)
            if approx_recip:
                inv = pl.reciprocal(safe, approx=True)     # EUP slot
            else:
                inv = 1.0 / safe                           # exact on f32 path
            agg = acc * inv
            # Degree column of `agg` hits zero-padded rows of W -> no effect.
            h = jnp.dot(agg.astype(w_ref.dtype), w_ref[...],
                        preferred_element_type=jnp.float32) + b_ref[...]
            out_ref[...] = h.astype(out_ref.dtype)

    return kernel


def gcn_layer(adj, feature, weight, bias, *, tm=1024, tk=1024,
              compute_dtype=jnp.bfloat16, adj_dtype=jnp.int8,
              feat_resident=None, feat_resident_bytes=16 * 1024 * 1024):
    """adj: [N, N] (adj[i, j]=1 iff edge j->i), feature: [N, Din],
    weight: [Dout, Din], bias: [Dout].  Returns [N, Dout] in feature.dtype."""
    n, din = feature.shape
    dout, din_w = weight.shape
    assert din_w == din and adj.shape == (n, n)

    cd = jnp.dtype(compute_dtype)
    cb = cd.itemsize
    ab = jnp.dtype(adj_dtype).itemsize

    # Lane-dense feature dims; reserve one padding column (index `din`) for the
    # all-ones degree column.
    din_p = _round_up(din + 1, 128)
    dout_p = _round_up(dout, 128)
    deg_col = din

    # Sublane packing on the tm axis is set by the narrowest operand (int8
    # adjacency packs 32 rows per vreg tile).
    row_mult = 32 if ab == 1 else (16 if ab == 2 else 8)
    tm = min(_round_up(tm, row_mult), _round_up(n, row_mult))
    tk = min(_round_up(tk, 128), _round_up(n, 128))
    n_m = _round_up(n, tm)
    n_k = _round_up(n, tk)
    # NOTE(v7x): if perf matters at scale, pick tm so n_m//tm is even (and >=4)
    # for a balanced split of the "parallel" axis across the two TensorCores.

    # --- Wrapper-side prep: one fused elementwise pass builds the int8, padded,
    # self-loop-fixed adjacency (zero-in-degree rows get adj[i,i]=1 so the mean
    # over the single self message is feature[i], matching DGL). ---
    has_in_edge = jnp.any(adj != 0, axis=-1)                       # [n] bool
    need_self_loop = jnp.logical_not(has_in_edge)[:, None]         # [n, 1]
    diag = (jax.lax.broadcasted_iota(jnp.int32, (n, n), 0) ==
            jax.lax.broadcasted_iota(jnp.int32, (n, n), 1))
    adj_q = ((adj != 0) | (diag & need_self_loop)).astype(adj_dtype)
    if (n_m, n_k) == (n, n):
        adj_p = adj_q
    else:
        adj_p = jnp.zeros((n_m, n_k), adj_dtype).at[:n, :n].set(adj_q)

    feat_p = jnp.zeros((n_k, din_p), cd)
    feat_p = feat_p.at[:n, :din].set(feature.astype(cd))
    feat_p = feat_p.at[:n, deg_col].set(1.0)                       # degree column

    w_p = jnp.zeros((din_p, dout_p), cd).at[:din, :dout].set(weight.T.astype(cd))
    b_p = jnp.zeros((1, dout_p), jnp.float32).at[:, :dout].set(
        bias.astype(jnp.float32)[None, :])

    # Resident-feature variant: whole padded feature matrix lives in VMEM
    # (constant index_map) so it streams from HBM exactly once.
    feat_bytes = n_k * din_p * cb
    if feat_resident is None:
        feat_resident = feat_bytes <= feat_resident_bytes
    if feat_resident:
        feat_spec = pl.BlockSpec((n_k, din_p), lambda i, k: (0, 0))
        feat_buf_bytes = 2 * feat_bytes
        feat_hbm_bytes = feat_bytes
    else:
        feat_spec = pl.BlockSpec((tk, din_p), lambda i, k: (k, 0))
        feat_buf_bytes = 2 * tk * din_p * cb
        feat_hbm_bytes = (n_m // tm) * feat_bytes   # re-streamed once per i tile

    grid = (n_m // tm, n_k // tk)

    # Exact VMEM budget (double-buffered streams + resident operands + scratch),
    # with headroom, capped below v7x's 64 MiB physical VMEM.
    vmem_need = (2 * tm * tk * ab            # adjacency tiles
                 + feat_buf_bytes            # feature tiles / resident copy
                 + 2 * tm * dout_p * 4       # output tiles
                 + 2 * din_p * dout_p * cb   # resident weight
                 + 2 * dout_p * 4            # resident bias
                 + tm * din_p * 4)           # f32 accumulator scratch
    vmem_limit = int(min(max(vmem_need * 5 // 4 + (2 << 20), 16 << 20), 56 << 20))

    cost = pl.CostEstimate(
        flops=2 * n_m * n_k * din_p + 2 * n_m * din_p * dout_p,
        transcendentals=n_m,
        bytes_accessed=(n_m * n_k * ab + feat_hbm_bytes
                        + din_p * dout_p * cb + dout_p * 4
                        + n_m * dout_p * 4),
    )

    kernel = _make_gcn_kernel(tk, deg_col, feat_resident,
                              approx_recip=(cb < 4))

    out_p = pl.pallas_call(
        kernel,
        out_shape=jax.ShapeDtypeStruct((n_m, dout_p), jnp.float32),
        grid_spec=pltpu.PrefetchScalarGridSpec(
            num_scalar_prefetch=0,
            grid=grid,
            in_specs=[
                pl.BlockSpec((tm, tk), lambda i, k: (i, k)),          # adjacency (int8)
                feat_spec,                                            # source features
                pl.BlockSpec((din_p, dout_p), lambda i, k: (0, 0)),   # W (resident)
                pl.BlockSpec((1, dout_p), lambda i, k: (0, 0)),       # bias (resident)
            ],
            out_specs=pl.BlockSpec((tm, dout_p), lambda i, k: (i, 0)),
            scratch_shapes=[pltpu.VMEM((tm, din_p), jnp.float32)],
        ),
        compiler_params=pltpu.CompilerParams(
            dimension_semantics=("parallel", "arbitrary"),
            vmem_limit_bytes=vmem_limit,
        ),
        cost_estimate=cost,
    )(adj_p, feat_p, w_p, b_p)

    return out_p[:n, :dout].astype(feature.dtype)


def _reference(adj, feature, weight, bias):
    deg = jnp.sum(adj, axis=-1, keepdims=True)
    summed = jnp.dot(adj, feature, precision=jax.lax.Precision.HIGHEST)
    mean = summed / jnp.maximum(deg, 1.0)
    agg = jnp.where(deg > 0.0, mean, feature)      # DGL: zero-in-degree keeps h
    return jnp.dot(agg, weight.T, precision=jax.lax.Precision.HIGHEST) + bias


def _make_inputs(key, n, dim_in, dim_out, density=0.3):
    k_adj, k_feat, k_w, k_b = jax.random.split(key, 4)
    adj = (jax.random.uniform(k_adj, (n, n)) < density).astype(jnp.float32)
    adj = adj * (1.0 - jnp.eye(n, dtype=jnp.float32))   # no self-loops
    adj = adj.at[0, :].set(0.0)                          # force a zero-in-degree node
    feature = jax.random.normal(k_feat, (n, dim_in), dtype=jnp.float32)
    bound = 1.0 / (dim_in ** 0.5)
    weight = jax.random.uniform(k_w, (dim_out, dim_in), minval=-bound, maxval=bound)
    bias = jax.random.uniform(k_b, (dim_out,), minval=-bound, maxval=bound)
    return adj, feature, weight, bias


if __name__ == "__main__":
    key = jax.random.PRNGKey(0)
    k_small, k_big = jax.random.split(key)

    # Small case (matches the module's nn.Linear(dim_in=32, dim_out=32)).
    N, DIM_IN, DIM_OUT = 16, 32, 32
    adj, feature, weight, bias = _make_inputs(k_small, N, DIM_IN, DIM_OUT)
    ref = _reference(adj, feature, weight, bias)

    out_f32 = jax.block_until_ready(
        gcn_layer(adj, feature, weight, bias, compute_dtype=jnp.float32))
    assert out_f32.shape == (N, DIM_OUT)
    assert jnp.allclose(out_f32, ref, atol=5e-3, rtol=5e-3), \
        float(jnp.max(jnp.abs(out_f32 - ref)))

    out_bf16 = jax.block_until_ready(
        gcn_layer(adj, feature, weight, bias, compute_dtype=jnp.bfloat16))
    assert jnp.allclose(out_bf16, ref, atol=5e-2, rtol=5e-2), \
        float(jnp.max(jnp.abs(out_bf16 - ref)))

    # Larger case forcing a multi-tile grid (exercises k-accumulation, pl.when
    # init/finalize, and the streamed-feature path).
    N2 = 320
    adj2, feature2, weight2, bias2 = _make_inputs(k_big, N2, DIM_IN, DIM_OUT)
    ref2 = _reference(adj2, feature2, weight2, bias2)
    out2 = jax.block_until_ready(
        gcn_layer(adj2, feature2, weight2, bias2, tm=64, tk=128,
                  compute_dtype=jnp.bfloat16, feat_resident=False))  # grid (5, 3)
    assert out2.shape == (N2, DIM_OUT)
    assert jnp.allclose(out2, ref2, atol=5e-2, rtol=5e-2), \
        float(jnp.max(jnp.abs(out2 - ref2)))

    # Same problem through the VMEM-resident feature path (features DMA'd once).
    out3 = jax.block_until_ready(
        gcn_layer(adj2, feature2, weight2, bias2, tm=64, tk=128,
                  compute_dtype=jnp.bfloat16, feat_resident=True))
    assert jnp.allclose(out3, ref2, atol=5e-2, rtol=5e-2), \
        float(jnp.max(jnp.abs(out3 - ref2)))

    print("KERNEL_OK")
</pallas_src>

<mosaic_0001>
module attributes {stable_mosaic.version = 11 : i64} {
  func.func @kernel(%arg0: i32, %arg1: i32, %arg2: memref<32x128xi8, #tpu.memory_space<vmem>>, %arg3: memref<128x128xf32, #tpu.memory_space<vmem>>, %arg4: memref<128x128xf32, #tpu.memory_space<vmem>>, %arg5: memref<1x128xf32, #tpu.memory_space<vmem>>, %arg6: memref<32x128xf32, #tpu.memory_space<vmem>>, %arg7: memref<32x128xf32, #tpu.memory_space<vmem>>) attributes {dimension_semantics = [#tpu.dimension_semantics<parallel>, #tpu.dimension_semantics<arbitrary>], iteration_bounds = array<i64: 1, 1>, scalar_prefetch = 0 : i64, scratch_operands = 1 : i64, tpu.core_type = #tpu.core_type<tc>, window_params = [{transform_indices = @transform_0, window_bounds = array<i64: 32, 128>}, {pipeline_mode = #tpu.pipeline_mode<synchronous>, transform_indices = @transform_1, window_bounds = array<i64: 128, 128>}, {pipeline_mode = #tpu.pipeline_mode<synchronous>, transform_indices = @transform_2, window_bounds = array<i64: 128, 128>}, {pipeline_mode = #tpu.pipeline_mode<synchronous>, transform_indices = @transform_3, window_bounds = array<i64: 1, 128>}, {transform_indices = @transform_4, window_bounds = array<i64: 32, 128>}]} {
    %c0_i32 = arith.constant 0 : i32
    %0 = arith.cmpi eq, %arg1, %c0_i32 : i32
    %1 = arith.extui %0 : i1 to i32
    %c0_i32_0 = arith.constant 0 : i32
    %2 = arith.cmpi ne, %1, %c0_i32_0 : i32
    scf.if %2 {
      %cst_9 = arith.constant 0.000000e+00 : f32
      %16 = vector.broadcast %cst_9 : f32 to vector<32x128xf32>
      %c0_10 = arith.constant 0 : index
      %c0_11 = arith.constant 0 : index
      %17 = vector.load %arg7[%c0_10, %c0_11] : memref<32x128xf32, #tpu.memory_space<vmem>>, vector<32x128xf32>
      tpu.vector_store %arg7[%c0_10, %c0_11], %16 {strides = array<i32>} : memref<32x128xf32, #tpu.memory_space<vmem>>, vector<32x128xf32>,
    } else {
    }
    %c128_i32 = arith.constant 128 : i32
    %3 = arith.muli %arg1, %c128_i32 : i32
    %4 = tpu.assume_multiple %3, 128 : i32
    %5 = arith.index_cast %4 : i32 to index
    %c0 = arith.constant 0 : index
    %6 = vector.load %arg3[%5, %c0] : memref<128x128xf32, #tpu.memory_space<vmem>>, vector<128x128xf32>
    %c0_1 = arith.constant 0 : index
    %c0_2 = arith.constant 0 : index
    %7 = vector.load %arg2[%c0_1, %c0_2] : memref<32x128xi8, #tpu.memory_space<vmem>>, vector<32x128xi8>
    %8 = arith.sitofp %7 : vector<32x128xi8> to vector<32x128xf32>
    %c0_3 = arith.constant 0 : index
    %c0_4 = arith.constant 0 : index
    %9 = vector.load %arg7[%c0_3, %c0_4] : memref<32x128xf32, #tpu.memory_space<vmem>>, vector<32x128xf32>
    %cst = arith.constant dense<0.000000e+00> : vector<32x128xf32>
    %10 = tpu.matmul %8, %6, %cst {dimension_numbers = #tpu.dot_dimension_numbers<[1], [0], [0], [1], [0, 0, 1, 1], [], []>} : vector<32x128xf32>, vector<128x128xf32>, vector<32x128xf32> -> vector<32x128xf32>
    %11 = arith.addf %9, %10 : vector<32x128xf32>
    %c0_5 = arith.constant 0 : index
    %c0_6 = arith.constant 0 : index
    %12 = vector.load %arg7[%c0_5, %c0_6] : memref<32x128xf32, #tpu.memory_space<vmem>>, vector<32x128xf32>
    tpu.vector_store %arg7[%c0_5, %c0_6], %11 {strides = array<i32>} : memref<32x128xf32, #tpu.memory_space<vmem>>, vector<32x128xf32>,
    %c0_i32_7 = arith.constant 0 : i32
    %13 = arith.cmpi eq, %arg1, %c0_i32_7 : i32
    %14 = arith.extui %13 : i1 to i32
    %c0_i32_8 = arith.constant 0 : i32
    %15 = arith.cmpi ne, %14, %c0_i32_8 : i32
    scf.if %15 {
      %c0_9 = arith.constant 0 : index
      %c0_10 = arith.constant 0 : index
      %16 = vector.load %arg7[%c0_9, %c0_10] : memref<32x128xf32, #tpu.memory_space<vmem>>, vector<32x128xf32>
      %17 = vector.extract_strided_slice %16 {offsets = [0, 32], sizes = [32, 1], strides = [1, 1]} : vector<32x128xf32> to vector<32x1xf32>
      %cst_11 = arith.constant 1.000000e+00 : f32
      %18 = vector.broadcast %cst_11 : f32 to vector<32x1xf32>
      %19 = arith.maximumf %17, %18 : vector<32x1xf32>
      %cst_12 = arith.constant 1.000000e+00 : f32
      %20 = vector.broadcast %cst_12 : f32 to vector<32x1xf32>
      %21 = arith.divf %20, %19 : vector<32x1xf32>
      %22 = vector.broadcast %21 : vector<32x1xf32> to vector<32x128xf32>
      %23 = arith.mulf %16, %22 : vector<32x128xf32>
      %c0_13 = arith.constant 0 : index
      %c0_14 = arith.constant 0 : index
      %24 = vector.load %arg4[%c0_13, %c0_14] : memref<128x128xf32, #tpu.memory_space<vmem>>, vector<128x128xf32>
      %cst_15 = arith.constant dense<0.000000e+00> : vector<32x128xf32>
      %25 = tpu.matmul %23, %24, %cst_15 {dimension_numbers = #tpu.dot_dimension_numbers<[1], [0], [0], [1], [0, 0, 1, 1], [], []>} : vector<32x128xf32>, vector<128x128xf32>, vector<32x128xf32> -> vector<32x128xf32>
      %c0_16 = arith.constant 0 : index
      %c0_17 = arith.constant 0 : index
      %26 = vector.load %arg5[%c0_16, %c0_17] : memref<1x128xf32, #tpu.memory_space<vmem>>, vector<1x128xf32>
      %27 = vector.broadcast %26 : vector<1x128xf32> to vector<32x128xf32>
      %28 = arith.addf %25, %27 : vector<32x128xf32>
      %c0_18 = arith.constant 0 : index
      %c0_19 = arith.constant 0 : index
      %29 = vector.load %arg6[%c0_18, %c0_19] : memref<32x128xf32, #tpu.memory_space<vmem>>, vector<32x128xf32>
      tpu.vector_store %arg6[%c0_18, %c0_19], %28 {strides = array<i32>} : memref<32x128xf32, #tpu.memory_space<vmem>>, vector<32x128xf32>,
    } else {
    }
    return
  }
  func.func @transform_0(%arg0: i32, %arg1: i32) -> (i32, i32) {
    %c0_i32 = arith.constant 0 : i32
    return %arg0, %arg1 : i32, i32
  }
  func.func @transform_1(%arg0: i32, %arg1: i32) -> (i32, i32) {
    %c0_i32 = arith.constant 0 : i32
    %c0_i32_0 = arith.constant 0 : i32
    %c0_i32_1 = arith.constant 0 : i32
    return %c0_i32, %c0_i32_0 : i32, i32
  }
  func.func @transform_2(%arg0: i32, %arg1: i32) -> (i32, i32) {
    %c0_i32 = arith.constant 0 : i32
    %c0_i32_0 = arith.constant 0 : i32
    %c0_i32_1 = arith.constant 0 : i32
    return %c0_i32, %c0_i32_0 : i32, i32
  }
  func.func @transform_3(%arg0: i32, %arg1: i32) -> (i32, i32) {
    %c0_i32 = arith.constant 0 : i32
    %c0_i32_0 = arith.constant 0 : i32
    %c0_i32_1 = arith.constant 0 : i32
    return %c0_i32, %c0_i32_0 : i32, i32
  }
  func.func @transform_4(%arg0: i32, %arg1: i32) -> (i32, i32) {
    %c0_i32 = arith.constant 0 : i32
    %c0_i32_0 = arith.constant 0 : i32
    return %arg0, %c0_i32 : i32, i32
  }
}

</mosaic_0001>

<llo_original>
// kernel: tpu_custom_call.1
$region0: #{tpu_custom_call.1}
  #allocation0 [shape = 'u32[]', space=smem, size = 0x4, offset = 0x4, fixed_abs, tag = 'smem constant byte address 0x4 - core index']
  #allocation1 [shape = 'u32[72,128]{1,0:T(1,128)}', space=vmem, size = 0x9000, scoped, tag = 'internal scratch']
  #allocation2 [shape = 'f32[32,128]{1,0:T(8,128)}', space=vmem, size = 0x4000, scoped, tag = 'scratch operand']
  %s0 = inlined_call_operand.hbm [shape: s8[32,128], index: 0, kind: input, shape index: {}]
  %s1 = inlined_call_operand.hbm [shape: f32[128,128], index: 1, kind: input, shape index: {}]
  %s2 = inlined_call_operand.hbm [shape: f32[128,128], index: 2, kind: input, shape index: {}]
  %s3 = inlined_call_operand.vmem [shape: f32[1,128], index: 3, kind: input, shape index: {}]
  %s4 = inlined_call_operand.hbm [shape: f32[32,128], index: 4, kind: output, shape index: {}]
  %s5 = sld [smem:[#allocation0]]
  $region46: #{tpu_custom_call.1} parent=0
    _
  %s7 = ssub.s32 1, %s5
  %s8 = scalar_select 0, %s7, %s5
  $region1: #{tpu_custom_call.1} parent=0
    #allocation3 [shape = 'u8[4096]{0}', space=vmem, size = 0x1000, scoped, tag = 'input window, operand 0, single buffered']
    #allocation4 [shape = 's32[1]{0}', space=sflag, size = 0x4, scoped, tag = 'scoped memory for tpu_custom_call.1']
    #allocation5 [shape = 's32[1]{0}', space=sflag, size = 0x4, scoped, tag = 'scoped memory for tpu_custom_call.1']
    #allocation6 [shape = 'u8[65536]{0}', space=vmem, size = 0x10000, scoped, tag = 'input window, operand 1, single buffered']
    #allocation7 [shape = 's32[1]{0}', space=sflag, size = 0x4, scoped, tag = 'scoped memory for tpu_custom_call.1']
    #allocation8 [shape = 'u8[65536]{0}', space=vmem, size = 0x10000, scoped, tag = 'input window, operand 2, single buffered']
    #allocation9 [shape = 'u8[16384]{0}', space=vmem, size = 0x4000, scoped, tag = 'output window, operand 0, single buffered']
    %9 = vsyncpa [#allocation4], 0
    %10 = vsyncpa [#allocation7], 0
    %11 = vsyncpa [#allocation5], 0
    // Predicated region
    $region2: #{tpu_custom_call.1} parent=1 // pred_check
      _
    $region3: #{tpu_custom_call.1} parent=1 // pred_check_branch
      %13 = sbr.rel (0) target = $region5
    $region4: #{tpu_custom_call.1} parent=1 // pred_region
      %15 = vsyncadd [#allocation4], 0
      %s17 = sshll.u32 %s0, 4
      %s18 = int_to_ptr.hbm [resolvable:$true] %s17
      %s19 = sshll.u32 [#allocation3], 4
      %s20 = int_to_ptr.vmem [resolvable:$true] %s19
      %22 = dma.hbm_to_vmem [thread:$0]  %s18, 128, %s20, [#allocation4]
    $region5: #{tpu_custom_call.1} parent=1 // pred_fallthru
      _
    // Predicated region
    $region6: #{tpu_custom_call.1} parent=1 // pred_check
      _
    $region7: #{tpu_custom_call.1} parent=1 // pred_check_branch
      %24 = sbr.rel (0) target = $region9
    $region8: #{tpu_custom_call.1} parent=1 // pred_region
      %26 = vsyncadd [#allocation7], 0
      %s27 = sshll.u32 %s1, 4
      %s28 = int_to_ptr.hbm [resolvable:$true] %s27
      %s29 = sshll.u32 [#allocation6], 4
      %s30 = int_to_ptr.vmem [resolvable:$true] %s29
      %35 = dma.hbm_to_vmem [thread:$0]  %s28, 2048, %s30, [#allocation7], 128, 128, 8
    $region9: #{tpu_custom_call.1} parent=1 // pred_fallthru
      _
    // Predicated region
    $region10: #{tpu_custom_call.1} parent=1 // pred_check
      _
    $region11: #{tpu_custom_call.1} parent=1 // pred_check_branch
      %37 = sbr.rel (0) target = $region13
    $region12: #{tpu_custom_call.1} parent=1 // pred_region
      %39 = vsyncadd [#allocation7], 0
      %s40 = sshll.u32 %s2, 4
      %s41 = int_to_ptr.hbm [resolvable:$true] %s40
      %s42 = sshll.u32 [#allocation8], 4
      %s43 = int_to_ptr.vmem [resolvable:$true] %s42
      %48 = dma.hbm_to_vmem [thread:$0]  %s41, 2048, %s43, [#allocation7], 128, 128, 8
    $region13: #{tpu_custom_call.1} parent=1 // pred_fallthru
      _
    // Predicated region
    $region14: #{tpu_custom_call.1} parent=1 // pred_check
      _
    $region15: #{tpu_custom_call.1} parent=1 // pred_check_branch
      %50 = sbr.rel (0) target = $region17
    $region16: #{tpu_custom_call.1} parent=1 // pred_region
      _
    $region17: #{tpu_custom_call.1} parent=1 // pred_fallthru
      _
    // Predicated region
    $region18: #{tpu_custom_call.1} parent=1 // pred_check
      _
    $region19: #{tpu_custom_call.1} parent=1 // pred_check_branch
      %52 = sbr.rel (0) target = $region21
    $region20: #{tpu_custom_call.1} parent=1 // pred_region
      %54 = dma.done [#allocation4], 128
    $region21: #{tpu_custom_call.1} parent=1 // pred_fallthru
      _
    // Predicated region
    $region22: #{tpu_custom_call.1} parent=1 // pred_check
      _
    $region23: #{tpu_custom_call.1} parent=1 // pred_check_branch
      %56 = sbr.rel (0) target = $region25
    $region24: #{tpu_custom_call.1} parent=1 // pred_region
      %58 = dma.done [#allocation7], 2048
    $region25: #{tpu_custom_call.1} parent=1 // pred_fallthru
      _
    // Predicated region
    $region26: #{tpu_custom_call.1} parent=1 // pred_check
      _
    $region27: #{tpu_custom_call.1} parent=1 // pred_check_branch
      %60 = sbr.rel (0) target = $region29
    $region28: #{tpu_custom_call.1} parent=1 // pred_region
      %62 = dma.done [#allocation7], 2048
    $region29: #{tpu_custom_call.1} parent=1 // pred_fallthru
      _
    %p63 = scmp.eq.s32.totalorder 0, 0
    // Predicated region
    $region30: #{tpu_custom_call.1} parent=1 // pred_check
      %p64 = pneg %p63
    $region31: #{tpu_custom_call.1} parent=1 // pred_check_branch
      %66 = sbr.rel (%p64) target = $region33
    $region32: #{tpu_custom_call.1} parent=1 // pred_region
      %67 = vst [vmem:[#allocation2] sm:$0xff] 0.0
      %68 = vst [vmem:[#allocation2 + $0x8] sm:$0xff] 0.0
      %69 = vst [vmem:[#allocation2 + $0x10] sm:$0xff] 0.0
      %70 = vst [vmem:[#allocation2 + $0x18] sm:$0xff] 0.0
    $region33: #{tpu_custom_call.1} parent=1 // pred_fallthru
      _
    %s71 = smul.u32 0, 128
    %s72 = scalar_lea.vmem [#allocation6], %s71
    %v73 = vld [vmem:[%s72] sm:$0xff]
    %v74 = vld [vmem:[%s72 + $0x8] sm:$0xff]
    %v75 = vld [vmem:[%s72 + $0x10] sm:$0xff]
    %v76 = vld [vmem:[%s72 + $0x18] sm:$0xff]
    %v77 = vld [vmem:[%s72 + $0x20] sm:$0xff]
    %v78 = vld [vmem:[%s72 + $0x28] sm:$0xff]
    %v79 = vld [vmem:[%s72 + $0x30] sm:$0xff]
    %v80 = vld [vmem:[%s72 + $0x38] sm:$0xff]
    %v81 = vld [vmem:[%s72 + $0x40] sm:$0xff]
    %v82 = vld [vmem:[%s72 + $0x48] sm:$0xff]
    %v83 = vld [vmem:[%s72 + $0x50] sm:$0xff]
    %v84 = vld [vmem:[%s72 + $0x58] sm:$0xff]
    %v85 = vld [vmem:[%s72 + $0x60] sm:$0xff]
    %v86 = vld [vmem:[%s72 + $0x68] sm:$0xff]
    %v87 = vld [vmem:[%s72 + $0x70] sm:$0xff]
    %v88 = vld [vmem:[%s72 + $0x78] sm:$0xff]
    %v89 = vld [vmem:[#allocation3] sm:$0xff]
    %v90 = vunpack.c.0.s8 %v89
    %v91 = vunpack.c.1.s8 %v89
    %v92 = vunpack.c.2.s8 %v89
    %v93 = vunpack.c.3.s8 %v89
    %v94 = vcvt.s32.f32 %v90
    %v95 = vcvt.s32.f32 %v91
    %v96 = vcvt.s32.f32 %v92
    %v97 = vcvt.s32.f32 %v93
    %v98 = vld [vmem:[#allocation2] sm:$0xff]
    %v99 = vld [vmem:[#allocation2 + $0x8] sm:$0xff]
    %v100 = vld [vmem:[#allocation2 + $0x10] sm:$0xff]
    %v101 = vld [vmem:[#allocation2 + $0x18] sm:$0xff]
    %102 = vmatpush.msra.mxu0 %v88
    %103 = vmatpush.msra.mxu0 %v87
    %104 = vmatpush.msra.mxu0 %v86
    %105 = vmatpush.msra.mxu0 %v85
    %106 = vmatpush.msra.mxu0 %v84
    %107 = vmatpush.msra.mxu0 %v83
    %108 = vmatpush.msra.mxu0 %v82
    %109 = vmatpush.msra.mxu0 %v81
    %110 = vmatpush.msra.mxu0 %v80
    %111 = vmatpush.msra.mxu0 %v79
    %112 = vmatpush.msra.mxu0 %v78
    %113 = vmatpush.msra.mxu0 %v77
    %114 = vmatpush.msra.mxu0 %v76
    %115 = vmatpush.msra.mxu0 %v75
    %116 = vmatpush.msra.mxu0 %v74
    %117 = vmatpush.msra.mxu0 %v73
    %118 = vmatmul.f32.gmra.mxu0 %v94
    %v119 = vpop.f32.mrf.mxu0
    %v120 = vadd.f32 0.0, %v119
    %121 = vmatmul.f32.gmra.mxu0 %v95
    %v122 = vpop.f32.mrf.mxu0
    %v123 = vadd.f32 0.0, %v122
    %124 = vmatmul.f32.gmra.mxu0 %v96
    %v125 = vpop.f32.mrf.mxu0
    %v126 = vadd.f32 0.0, %v125
    %127 = vmatmul.f32.gmra.mxu0 %v97
    %v128 = vpop.f32.mrf.mxu0
    %v129 = vadd.f32 0.0, %v128
    %130 = vdwg.mxu0
    %v131 = vadd.f32 %v98, %v120
    %v132 = vadd.f32 %v99, %v123
    %v133 = vadd.f32 %v100, %v126
    %v134 = vadd.f32 %v101, %v129
    %135 = vst [vmem:[#allocation2] sm:$0xff] %v131
    %136 = vst [vmem:[#allocation2 + $0x8] sm:$0xff] %v132
    %137 = vst [vmem:[#allocation2 + $0x10] sm:$0xff] %v133
    %138 = vst [vmem:[#allocation2 + $0x18] sm:$0xff] %v134
    // Predicated region
    $region34: #{tpu_custom_call.1} parent=1 // pred_check
      %p139 = pneg %p63
    $region35: #{tpu_custom_call.1} parent=1 // pred_check_branch
      %141 = sbr.rel (%p139) target = $region37
    $region36: #{tpu_custom_call.1} parent=1 // pred_region
      %v142 = vld [vmem:[#allocation2] sm:$0xff]
      %v143 = vld [vmem:[#allocation2 + $0x8] sm:$0xff]
      %v144 = vld [vmem:[#allocation2 + $0x10] sm:$0xff]
      %v145 = vld [vmem:[#allocation2 + $0x18] sm:$0xff]
      %v146 = vmax.f32 %v142, 1.0
      %v147 = vmax.f32 %v143, 1.0
      %v148 = vmax.f32 %v144, 1.0
      %v149 = vmax.f32 %v145, 1.0
      %v150 = vrcp.pop %v146
      %v151 = vmul.f32 %v146, %v150
      %v152 = vsub.f32 1.0, %v151
      %v153 = vmul.f32 %v150, %v152
      %v154 = vadd.f32 %v150, %v153
      %vm155 = vweird.f32 %v146
      %vm156 = vweird.f32 %v150
      %vm157 = vmor %vm155, %vm156
      %v158 = vsel %vm157, %v150, %v154
      %v159 = vand.u32 2147483647, %v146
      %vm160 = vcmp.eq.f32.partialorder %v159, 8.507059e+37
      %v161 = vand.u32 %v146, 2147483648
      %v162 = vor.u32 1.1754944e-38, %v161
      %v163 = vsel %vm160, %v162, %v158
      %v164 = vmul.f32 1.0, %v163
      %v165 = vrcp.pop %v147
      %v166 = vmul.f32 %v147, %v165
      %v167 = vsub.f32 1.0, %v166
      %v168 = vmul.f32 %v165, %v167
      %v169 = vadd.f32 %v165, %v168
      %vm170 = vweird.f32 %v147
      %vm171 = vweird.f32 %v165
      %vm172 = vmor %vm170, %vm171
      %v173 = vsel %vm172, %v165, %v169
      %v174 = vand.u32 2147483647, %v147
      %vm175 = vcmp.eq.f32.partialorder %v174, 8.507059e+37
      %v176 = vand.u32 %v147, 2147483648
      %v177 = vor.u32 1.1754944e-38, %v176
      %v178 = vsel %vm175, %v177, %v173
      %v179 = vmul.f32 1.0, %v178
      %v180 = vrcp.pop %v148
      %v181 = vmul.f32 %v148, %v180
      %v182 = vsub.f32 1.0, %v181
      %v183 = vmul.f32 %v180, %v182
      %v184 = vadd.f32 %v180, %v183
      %vm185 = vweird.f32 %v148
      %vm186 = vweird.f32 %v180
      %vm187 = vmor %vm185, %vm186
      %v188 = vsel %vm187, %v180, %v184
      %v189 = vand.u32 2147483647, %v148
      %vm190 = vcmp.eq.f32.partialorder %v189, 8.507059e+37
      %v191 = vand.u32 %v148, 2147483648
      %v192 = vor.u32 1.1754944e-38, %v191
      %v193 = vsel %vm190, %v192, %v188
      %v194 = vmul.f32 1.0, %v193
      %v195 = vrcp.pop %v149
      %v196 = vmul.f32 %v149, %v195
      %v197 = vsub.f32 1.0, %v196
      %v198 = vmul.f32 %v195, %v197
      %v199 = vadd.f32 %v195, %v198
      %vm200 = vweird.f32 %v149
      %vm201 = vweird.f32 %v195
      %vm202 = vmor %vm200, %vm201
      %v203 = vsel %vm202, %v195, %v199
      %v204 = vand.u32 2147483647, %v149
      %vm205 = vcmp.eq.f32.partialorder %v204, 8.507059e+37
      %v206 = vand.u32 %v149, 2147483648
      %v207 = vor.u32 1.1754944e-38, %v206
      %v208 = vsel %vm205, %v207, %v203
      %v209 = vmul.f32 1.0, %v208
      %211 = vset.pattern.permute.xlu0 32
      %212 = vperm.xlu0 %211, %v164
      %v213 = vpop.permute.xlu0 %212
      %216 = vset.pattern.permute.xlu0 32
      %217 = vperm.xlu0 %216, %v179
      %v218 = vpop.permute.xlu0 %217
      %221 = vset.pattern.permute.xlu0 32
      %222 = vperm.xlu0 %221, %v194
      %v223 = vpop.permute.xlu0 %222
      %226 = vset.pattern.permute.xlu0 32
      %227 = vperm.xlu0 %226, %v209
      %v228 = vpop.permute.xlu0 %227
      %v230 = vmul.f32 %v142, %v213
      %v231 = vmul.f32 %v143, %v218
      %v232 = vmul.f32 %v144, %v223
      %v233 = vmul.f32 %v145, %v228
      %v234 = vld [vmem:[#allocation8] sm:$0xff]
      %v235 = vld [vmem:[#allocation8 + $0x8] sm:$0xff]
      %v236 = vld [vmem:[#allocation8 + $0x10] sm:$0xff]
      %v237 = vld [vmem:[#allocation8 + $0x18] sm:$0xff]
      %v238 = vld [vmem:[#allocation8 + $0x20] sm:$0xff]
      %v239 = vld [vmem:[#allocation8 + $0x28] sm:$0xff]
      %v240 = vld [vmem:[#allocation8 + $0x30] sm:$0xff]
      %v241 = vld [vmem:[#allocation8 + $0x38] sm:$0xff]
      %v242 = vld [vmem:[#allocation8 + $0x40] sm:$0xff]
      %v243 = vld [vmem:[#allocation8 + $0x48] sm:$0xff]
      %v244 = vld [vmem:[#allocation8 + $0x50] sm:$0xff]
      %v245 = vld [vmem:[#allocation8 + $0x58] sm:$0xff]
      %v246 = vld [vmem:[#allocation8 + $0x60] sm:$0xff]
      %v247 = vld [vmem:[#allocation8 + $0x68] sm:$0xff]
      %v248 = vld [vmem:[#allocation8 + $0x70] sm:$0xff]
      %v249 = vld [vmem:[#allocation8 + $0x78] sm:$0xff]
      %v250 = vld [vmem:[%s3] sm:$0x1]
      %v252 = vperm.slane %v250, 0
      %254 = vmatpush.msra.mxu0 %v249
      %255 = vmatpush.msra.mxu0 %v248
      %256 = vmatpush.msra.mxu0 %v247
      %257 = vmatpush.msra.mxu0 %v246
      %258 = vmatpush.msra.mxu0 %v245
      %259 = vmatpush.msra.mxu0 %v244
      %260 = vmatpush.msra.mxu0 %v243
      %261 = vmatpush.msra.mxu0 %v242
      %262 = vmatpush.msra.mxu0 %v241
      %263 = vmatpush.msra.mxu0 %v240
      %264 = vmatpush.msra.mxu0 %v239
      %265 = vmatpush.msra.mxu0 %v238
      %266 = vmatpush.msra.mxu0 %v237
      %267 = vmatpush.msra.mxu0 %v236
      %268 = vmatpush.msra.mxu0 %v235
      %269 = vmatpush.msra.mxu0 %v234
      %270 = vmatmul.f32.gmra.mxu0 %v230
      %v271 = vpop.f32.mrf.mxu0
      %v272 = vadd.f32 %v252, %v271
      %273 = vmatmul.f32.gmra.mxu0 %v231
      %v274 = vpop.f32.mrf.mxu0
      %v275 = vadd.f32 %v252, %v274
      %276 = vmatmul.f32.gmra.mxu0 %v232
      %v277 = vpop.f32.mrf.mxu0
      %v278 = vadd.f32 %v252, %v277
      %279 = vmatmul.f32.gmra.mxu0 %v233
      %v280 = vpop.f32.mrf.mxu0
      %v281 = vadd.f32 %v252, %v280
      %282 = vdwg.mxu0
      %283 = vst [vmem:[#allocation9] sm:$0xff] %v272
      %284 = vst [vmem:[#allocation9 + $0x8] sm:$0xff] %v275
      %285 = vst [vmem:[#allocation9 + $0x10] sm:$0xff] %v278
      %286 = vst [vmem:[#allocation9 + $0x18] sm:$0xff] %v281
    $region37: #{tpu_custom_call.1} parent=1 // pred_fallthru
      _
    // Predicated region
    $region38: #{tpu_custom_call.1} parent=1 // pred_check
      _
    $region39: #{tpu_custom_call.1} parent=1 // pred_check_branch
      %288 = sbr.rel (0) target = $region41
    $region40: #{tpu_custom_call.1} parent=1 // pred_region
      %290 = vsyncadd [#allocation5], 0
      %s291 = sshll.u32 [#allocation9], 4
      %s292 = int_to_ptr.vmem [resolvable:$true] %s291
      %s293 = sshll.u32 %s4, 4
      %s294 = int_to_ptr.hbm [resolvable:$true] %s293
      %299 = dma.vmem_to_hbm [thread:$0]  %s292, 512, %s294, [#allocation5], 128, 128, 8
    $region41: #{tpu_custom_call.1} parent=1 // pred_fallthru
      _
    // Predicated region
    $region42: #{tpu_custom_call.1} parent=1 // pred_check
      _
    $region43: #{tpu_custom_call.1} parent=1 // pred_check_branch
      %301 = sbr.rel (0) target = $region45
    $region44: #{tpu_custom_call.1} parent=1 // pred_region
      %303 = dma.done [#allocation5], 512
    $region45: #{tpu_custom_call.1} parent=1 // pred_fallthru
      _
    %304 = vsyncpa [#allocation4], 1
    %305 = vsyncpa [#allocation7], 1
    %306 = vsyncpa [#allocation5], 1

</llo_original>
